<compile_context>
chip_gen: v7x
topology: tpu7x:2x2x1
jax: 0.10.0
libtpu: 0.0.40
codegen_flags: <defaults>
</compile_context>

<pallas_src>
import functools

import jax
import jax.numpy as jnp
from jax.experimental import pallas as pl
from jax.experimental.pallas import tpu as pltpu


def _add_threshold_kernel(w_ref, b_ref, x_ref, tm_ref, o_ref, *, threshold, C):
    # w_ref: (C*C,) SMEM  -- folded conv weight, w[co*C + ci] (BN scale folded in)
    # b_ref: (C,)   SMEM  -- folded BN bias
    # x_ref, tm_ref, o_ref: (1, C, rows, cols) VMEM blocks, (rows, cols) lane-dense.
    for co in range(C):
        # 1x1 conv for output channel `co`: C_in scalar x tile FMAs on the VPU.
        acc = tm_ref[0, 0] * w_ref[co * C + 0]
        for ci in range(1, C):
            acc = acc + tm_ref[0, ci] * w_ref[co * C + ci]
        bn = acc + b_ref[co]
        # F.threshold(v, thr, 0): keep value where v > thr, else 0.
        thr = jnp.where(bn > threshold, bn, 0.0)
        o_ref[0, co] = (x_ref[0, co].astype(bn.dtype) + thr).astype(o_ref.dtype)


def _pick_row_tile(rows_total, cols, C, n_batch, itemsize,
                   vmem_budget_bytes=12 << 20):
    """Rows per grid step. Budget = 2 (double-buffer) x 3 streams x C x cols,
    kept under v5e's 16 MiB default scoped VMEM (and well under v7x's 64 MiB
    physical VMEM).  Full-extent rows block is always layout-legal."""
    bytes_per_row = 2 * 3 * C * cols * itemsize
    cap = max(8, (vmem_budget_bytes // bytes_per_row) // 8 * 8)
    rt = rows_total if rows_total <= cap else cap
    # v7x megacore: with a single batch, make sure the grid has >= 2 steps.
    if n_batch == 1 and rt >= rows_total and rows_total >= 16:
        rt = ((rows_total + 1) // 2 + 7) // 8 * 8
    return rt


def add_threshold(x, threshold_map, conv_weight, gamma, beta,
                  running_mean, running_var, *, threshold=0.1, eps=1e-5,
                  row_tile=None):
    """x, threshold_map: NCHW arrays (f32 or bf16). conv_weight: (C, C, 1, 1)."""
    N, C, H, W = x.shape
    assert threshold_map.shape == x.shape
    assert conv_weight.shape == (C, C, 1, 1)
    itemsize = jnp.dtype(x.dtype).itemsize

    # Fold eval-mode BatchNorm into the conv weight and a per-channel bias:
    #   scale[co] * (sum_ci w[co,ci]*tm[ci]) + bias[co]
    #     == sum_ci (scale[co]*w[co,ci]) * tm[ci] + bias[co]
    scale = gamma.astype(jnp.float32) / jnp.sqrt(running_var.astype(jnp.float32) + eps)
    w_mat = conv_weight.reshape(C, C).astype(jnp.float32) * scale[:, None]
    w_flat = w_mat.reshape(C * C)                                   # (C*C,) -> SMEM
    bias = (beta.astype(jnp.float32) - running_mean.astype(jnp.float32) * scale)  # (C,)

    S = H * W
    if W % 128 == 0:
        # Operate directly on NCHW: spatial block over (H, W), no reshape at all.
        x_view, tm_view = x, threshold_map
        rows_total, cols, pad = H, W, 0
    else:
        # Flatten spatial to lanes; pad S to a multiple of 128 if needed so the
        # store path stays dense (padding is sliced off afterwards).
        pad = (-S) % 128
        x_view = x.reshape(N, C, S)
        tm_view = threshold_map.reshape(N, C, S)
        if pad:
            x_view = jnp.pad(x_view, ((0, 0), (0, 0), (0, pad)))
            tm_view = jnp.pad(tm_view, ((0, 0), (0, 0), (0, pad)))
        rows_total, cols = (S + pad) // 128, 128
        x_view = x_view.reshape(N, C, rows_total, cols)
        tm_view = tm_view.reshape(N, C, rows_total, cols)

    rt = row_tile if row_tile is not None else _pick_row_tile(
        rows_total, cols, C, N, itemsize)
    grid = (N, pl.cdiv(rows_total, rt))

    kernel = functools.partial(_add_threshold_kernel, threshold=threshold, C=C)

    cost = pl.CostEstimate(
        flops=N * C * S * (2 * C + 3),
        transcendentals=0,
        bytes_accessed=3 * N * C * S * itemsize + (C * C + C) * 4,
    )

    blk = pl.BlockSpec((1, C, rt, cols), lambda n, r, *_: (n, 0, r, 0))

    out_view = pl.pallas_call(
        kernel,
        out_shape=jax.ShapeDtypeStruct((N, C, rows_total, cols), x.dtype),
        grid_spec=pltpu.PrefetchScalarGridSpec(
            num_scalar_prefetch=2,       # w_flat, bias -> SMEM
            grid=grid,
            in_specs=[blk, blk],         # x, threshold_map
            out_specs=blk,
        ),
        compiler_params=pltpu.CompilerParams(
            dimension_semantics=("parallel", "parallel")),
        cost_estimate=cost,
    )(w_flat, bias, x_view, tm_view)

    if W % 128 == 0:
        return out_view
    out = out_view.reshape(N, C, rows_total * cols)
    if pad:
        out = out[:, :, :S]
    return out.reshape(N, C, H, W)


if __name__ == "__main__":
    key = jax.random.PRNGKey(0)
    k_x, k_tm, k_w, k_g, k_b = jax.random.split(key, 5)

    N, C, H, W = 2, 4, 16, 16
    threshold = 0.1

    x = jax.random.normal(k_x, (N, C, H, W), dtype=jnp.float32)
    threshold_map = jax.random.normal(k_tm, (N, C, H, W), dtype=jnp.float32)

    # Deterministic parameter init (synthetic, matching module shapes).
    conv_weight = jax.random.normal(k_w, (C, C, 1, 1), dtype=jnp.float32) * 0.1
    gamma = jax.random.uniform(k_g, (C,), dtype=jnp.float32,
                               minval=0.5, maxval=1.5)
    beta = jax.random.normal(k_b, (C,), dtype=jnp.float32) * 0.1
    running_mean = jnp.zeros((C,), dtype=jnp.float32)
    running_var = jnp.ones((C,), dtype=jnp.float32)

    out = add_threshold(x, threshold_map, conv_weight, gamma, beta,
                        running_mean, running_var, threshold=threshold)
    out = jax.block_until_ready(out)

    # Pure-JAX reference check (eval-mode BN).
    conv_ref = jnp.einsum("nchw,oc->nohw", threshold_map,
                          conv_weight.reshape(C, C))
    s = gamma / jnp.sqrt(running_var + 1e-5)
    b = beta - running_mean * s
    bn_ref = conv_ref * s[None, :, None, None] + b[None, :, None, None]
    thr_ref = jnp.where(bn_ref > threshold, bn_ref, 0.0)
    ref = x + thr_ref
    assert jnp.allclose(out, ref, atol=1e-5, rtol=1e-5), "mismatch vs reference"

    print("KERNEL_OK")
</pallas_src>

<mosaic_0001>
module attributes {stable_mosaic.version = 11 : i64} {
  func.func @_add_threshold_kernel(%arg0: i32, %arg1: i32, %arg2: memref<16xf32, #tpu.memory_space<smem>>, %arg3: memref<4xf32, #tpu.memory_space<smem>>, %arg4: memref<1x4x2x128xf32, #tpu.memory_space<vmem>>, %arg5: memref<1x4x2x128xf32, #tpu.memory_space<vmem>>, %arg6: memref<1x4x2x128xf32, #tpu.memory_space<vmem>>) attributes {dimension_semantics = [#tpu.dimension_semantics<parallel>, #tpu.dimension_semantics<parallel>], iteration_bounds = array<i64: 2, 1>, scalar_prefetch = 2 : i64, scratch_operands = 0 : i64, tpu.core_type = #tpu.core_type<tc>, window_params = [{transform_indices = @transform_0, window_bounds = array<i64: 1, 4, 2, 128>}, {transform_indices = @transform_1, window_bounds = array<i64: 1, 4, 2, 128>}, {transform_indices = @transform_2, window_bounds = array<i64: 1, 4, 2, 128>}]} {
    %c0 = arith.constant 0 : index
    %c0_0 = arith.constant 0 : index
    %c0_1 = arith.constant 0 : index
    %c0_2 = arith.constant 0 : index
    %0 = vector.load %arg5[%c0, %c0_0, %c0_1, %c0_2] : memref<1x4x2x128xf32, #tpu.memory_space<vmem>>, vector<1x1x2x128xf32>
    %1 = vector.shape_cast %0 : vector<1x1x2x128xf32> to vector<2x128xf32>
    %c0_3 = arith.constant 0 : index
    %2 = memref.load %arg2[%c0_3] : memref<16xf32, #tpu.memory_space<smem>>
    %3 = vector.broadcast %2 : f32 to vector<2x128xf32>
    %4 = arith.mulf %1, %3 : vector<2x128xf32>
    %c0_4 = arith.constant 0 : index
    %c1 = arith.constant 1 : index
    %c0_5 = arith.constant 0 : index
    %c0_6 = arith.constant 0 : index
    %5 = vector.load %arg5[%c0_4, %c1, %c0_5, %c0_6] : memref<1x4x2x128xf32, #tpu.memory_space<vmem>>, vector<1x1x2x128xf32>
    %6 = vector.shape_cast %5 : vector<1x1x2x128xf32> to vector<2x128xf32>
    %c1_7 = arith.constant 1 : index
    %7 = memref.load %arg2[%c1_7] : memref<16xf32, #tpu.memory_space<smem>>
    %8 = vector.broadcast %7 : f32 to vector<2x128xf32>
    %9 = arith.mulf %6, %8 : vector<2x128xf32>
    %10 = arith.addf %4, %9 : vector<2x128xf32>
    %c0_8 = arith.constant 0 : index
    %c2 = arith.constant 2 : index
    %c0_9 = arith.constant 0 : index
    %c0_10 = arith.constant 0 : index
    %11 = vector.load %arg5[%c0_8, %c2, %c0_9, %c0_10] : memref<1x4x2x128xf32, #tpu.memory_space<vmem>>, vector<1x1x2x128xf32>
    %12 = vector.shape_cast %11 : vector<1x1x2x128xf32> to vector<2x128xf32>
    %c2_11 = arith.constant 2 : index
    %13 = memref.load %arg2[%c2_11] : memref<16xf32, #tpu.memory_space<smem>>
    %14 = vector.broadcast %13 : f32 to vector<2x128xf32>
    %15 = arith.mulf %12, %14 : vector<2x128xf32>
    %16 = arith.addf %10, %15 : vector<2x128xf32>
    %c0_12 = arith.constant 0 : index
    %c3 = arith.constant 3 : index
    %c0_13 = arith.constant 0 : index
    %c0_14 = arith.constant 0 : index
    %17 = vector.load %arg5[%c0_12, %c3, %c0_13, %c0_14] : memref<1x4x2x128xf32, #tpu.memory_space<vmem>>, vector<1x1x2x128xf32>
    %18 = vector.shape_cast %17 : vector<1x1x2x128xf32> to vector<2x128xf32>
    %c3_15 = arith.constant 3 : index
    %19 = memref.load %arg2[%c3_15] : memref<16xf32, #tpu.memory_space<smem>>
    %20 = vector.broadcast %19 : f32 to vector<2x128xf32>
    %21 = arith.mulf %18, %20 : vector<2x128xf32>
    %22 = arith.addf %16, %21 : vector<2x128xf32>
    %c0_16 = arith.constant 0 : index
    %23 = memref.load %arg3[%c0_16] : memref<4xf32, #tpu.memory_space<smem>>
    %24 = vector.broadcast %23 : f32 to vector<2x128xf32>
    %25 = arith.addf %22, %24 : vector<2x128xf32>
    %cst = arith.constant 1.000000e-01 : f32
    %26 = vector.broadcast %cst : f32 to vector<2x128xf32>
    %27 = arith.cmpf ogt, %25, %26 : vector<2x128xf32>
    %cst_17 = arith.constant 0.000000e+00 : f32
    %28 = vector.broadcast %cst_17 : f32 to vector<2x128xf32>
    %29 = arith.select %27, %25, %28 : vector<2x128xi1>, vector<2x128xf32>
    %c0_18 = arith.constant 0 : index
    %c0_19 = arith.constant 0 : index
    %c0_20 = arith.constant 0 : index
    %c0_21 = arith.constant 0 : index
    %30 = vector.load %arg4[%c0_18, %c0_19, %c0_20, %c0_21] : memref<1x4x2x128xf32, #tpu.memory_space<vmem>>, vector<1x1x2x128xf32>
    %31 = vector.shape_cast %30 : vector<1x1x2x128xf32> to vector<2x128xf32>
    %32 = arith.addf %31, %29 : vector<2x128xf32>
    %c0_22 = arith.constant 0 : index
    %c0_23 = arith.constant 0 : index
    %c0_24 = arith.constant 0 : index
    %c0_25 = arith.constant 0 : index
    %33 = vector.load %arg6[%c0_22, %c0_23, %c0_24, %c0_25] : memref<1x4x2x128xf32, #tpu.memory_space<vmem>>, vector<1x1x2x128xf32>
    %34 = vector.shape_cast %33 : vector<1x1x2x128xf32> to vector<2x128xf32>
    %35 = vector.shape_cast %32 : vector<2x128xf32> to vector<1x1x2x128xf32>
    tpu.vector_store %arg6[%c0_22, %c0_23, %c0_24, %c0_25], %35 {strides = array<i32>} : memref<1x4x2x128xf32, #tpu.memory_space<vmem>>, vector<1x1x2x128xf32>,
    %c0_26 = arith.constant 0 : index
    %c0_27 = arith.constant 0 : index
    %c0_28 = arith.constant 0 : index
    %c0_29 = arith.constant 0 : index
    %36 = vector.load %arg5[%c0_26, %c0_27, %c0_28, %c0_29] : memref<1x4x2x128xf32, #tpu.memory_space<vmem>>, vector<1x1x2x128xf32>
    %37 = vector.shape_cast %36 : vector<1x1x2x128xf32> to vector<2x128xf32>
    %c4 = arith.constant 4 : index
    %38 = memref.load %arg2[%c4] : memref<16xf32, #tpu.memory_space<smem>>
    %39 = vector.broadcast %38 : f32 to vector<2x128xf32>
    %40 = arith.mulf %37, %39 : vector<2x128xf32>
    %c0_30 = arith.constant 0 : index
    %c1_31 = arith.constant 1 : index
    %c0_32 = arith.constant 0 : index
    %c0_33 = arith.constant 0 : index
    %41 = vector.load %arg5[%c0_30, %c1_31, %c0_32, %c0_33] : memref<1x4x2x128xf32, #tpu.memory_space<vmem>>, vector<1x1x2x128xf32>
    %42 = vector.shape_cast %41 : vector<1x1x2x128xf32> to vector<2x128xf32>
    %c5 = arith.constant 5 : index
    %43 = memref.load %arg2[%c5] : memref<16xf32, #tpu.memory_space<smem>>
    %44 = vector.broadcast %43 : f32 to vector<2x128xf32>
    %45 = arith.mulf %42, %44 : vector<2x128xf32>
    %46 = arith.addf %40, %45 : vector<2x128xf32>
    %c0_34 = arith.constant 0 : index
    %c2_35 = arith.constant 2 : index
    %c0_36 = arith.constant 0 : index
    %c0_37 = arith.constant 0 : index
    %47 = vector.load %arg5[%c0_34, %c2_35, %c0_36, %c0_37] : memref<1x4x2x128xf32, #tpu.memory_space<vmem>>, vector<1x1x2x128xf32>
    %48 = vector.shape_cast %47 : vector<1x1x2x128xf32> to vector<2x128xf32>
    %c6 = arith.constant 6 : index
    %49 = memref.load %arg2[%c6] : memref<16xf32, #tpu.memory_space<smem>>
    %50 = vector.broadcast %49 : f32 to vector<2x128xf32>
    %51 = arith.mulf %48, %50 : vector<2x128xf32>
    %52 = arith.addf %46, %51 : vector<2x128xf32>
    %c0_38 = arith.constant 0 : index
    %c3_39 = arith.constant 3 : index
    %c0_40 = arith.constant 0 : index
    %c0_41 = arith.constant 0 : index
    %53 = vector.load %arg5[%c0_38, %c3_39, %c0_40, %c0_41] : memref<1x4x2x128xf32, #tpu.memory_space<vmem>>, vector<1x1x2x128xf32>
    %54 = vector.shape_cast %53 : vector<1x1x2x128xf32> to vector<2x128xf32>
    %c7 = arith.constant 7 : index
    %55 = memref.load %arg2[%c7] : memref<16xf32, #tpu.memory_space<smem>>
    %56 = vector.broadcast %55 : f32 to vector<2x128xf32>
    %57 = arith.mulf %54, %56 : vector<2x128xf32>
    %58 = arith.addf %52, %57 : vector<2x128xf32>
    %c1_42 = arith.constant 1 : index
    %59 = memref.load %arg3[%c1_42] : memref<4xf32, #tpu.memory_space<smem>>
    %60 = vector.broadcast %59 : f32 to vector<2x128xf32>
    %61 = arith.addf %58, %60 : vector<2x128xf32>
    %cst_43 = arith.constant 1.000000e-01 : f32
    %62 = vector.broadcast %cst_43 : f32 to vector<2x128xf32>
    %63 = arith.cmpf ogt, %61, %62 : vector<2x128xf32>
    %cst_44 = arith.constant 0.000000e+00 : f32
    %64 = vector.broadcast %cst_44 : f32 to vector<2x128xf32>
    %65 = arith.select %63, %61, %64 : vector<2x128xi1>, vector<2x128xf32>
    %c0_45 = arith.constant 0 : index
    %c1_46 = arith.constant 1 : index
    %c0_47 = arith.constant 0 : index
    %c0_48 = arith.constant 0 : index
    %66 = vector.load %arg4[%c0_45, %c1_46, %c0_47, %c0_48] : memref<1x4x2x128xf32, #tpu.memory_space<vmem>>, vector<1x1x2x128xf32>
    %67 = vector.shape_cast %66 : vector<1x1x2x128xf32> to vector<2x128xf32>
    %68 = arith.addf %67, %65 : vector<2x128xf32>
    %c0_49 = arith.constant 0 : index
    %c1_50 = arith.constant 1 : index
    %c0_51 = arith.constant 0 : index
    %c0_52 = arith.constant 0 : index
    %69 = vector.load %arg6[%c0_49, %c1_50, %c0_51, %c0_52] : memref<1x4x2x128xf32, #tpu.memory_space<vmem>>, vector<1x1x2x128xf32>
    %70 = vector.shape_cast %69 : vector<1x1x2x128xf32> to vector<2x128xf32>
    %71 = vector.shape_cast %68 : vector<2x128xf32> to vector<1x1x2x128xf32>
    tpu.vector_store %arg6[%c0_49, %c1_50, %c0_51, %c0_52], %71 {strides = array<i32>} : memref<1x4x2x128xf32, #tpu.memory_space<vmem>>, vector<1x1x2x128xf32>,
    %c0_53 = arith.constant 0 : index
    %c0_54 = arith.constant 0 : index
    %c0_55 = arith.constant 0 : index
    %c0_56 = arith.constant 0 : index
    %72 = vector.load %arg5[%c0_53, %c0_54, %c0_55, %c0_56] : memref<1x4x2x128xf32, #tpu.memory_space<vmem>>, vector<1x1x2x128xf32>
    %73 = vector.shape_cast %72 : vector<1x1x2x128xf32> to vector<2x128xf32>
    %c8 = arith.constant 8 : index
    %74 = memref.load %arg2[%c8] : memref<16xf32, #tpu.memory_space<smem>>
    %75 = vector.broadcast %74 : f32 to vector<2x128xf32>
    %76 = arith.mulf %73, %75 : vector<2x128xf32>
    %c0_57 = arith.constant 0 : index
    %c1_58 = arith.constant 1 : index
    %c0_59 = arith.constant 0 : index
    %c0_60 = arith.constant 0 : index
    %77 = vector.load %arg5[%c0_57, %c1_58, %c0_59, %c0_60] : memref<1x4x2x128xf32, #tpu.memory_space<vmem>>, vector<1x1x2x128xf32>
    %78 = vector.shape_cast %77 : vector<1x1x2x128xf32> to vector<2x128xf32>
    %c9 = arith.constant 9 : index
    %79 = memref.load %arg2[%c9] : memref<16xf32, #tpu.memory_space<smem>>
    %80 = vector.broadcast %79 : f32 to vector<2x128xf32>
    %81 = arith.mulf %78, %80 : vector<2x128xf32>
    %82 = arith.addf %76, %81 : vector<2x128xf32>
    %c0_61 = arith.constant 0 : index
    %c2_62 = arith.constant 2 : index
    %c0_63 = arith.constant 0 : index
    %c0_64 = arith.constant 0 : index
    %83 = vector.load %arg5[%c0_61, %c2_62, %c0_63, %c0_64] : memref<1x4x2x128xf32, #tpu.memory_space<vmem>>, vector<1x1x2x128xf32>
    %84 = vector.shape_cast %83 : vector<1x1x2x128xf32> to vector<2x128xf32>
    %c10 = arith.constant 10 : index
    %85 = memref.load %arg2[%c10] : memref<16xf32, #tpu.memory_space<smem>>
    %86 = vector.broadcast %85 : f32 to vector<2x128xf32>
    %87 = arith.mulf %84, %86 : vector<2x128xf32>
    %88 = arith.addf %82, %87 : vector<2x128xf32>
    %c0_65 = arith.constant 0 : index
    %c3_66 = arith.constant 3 : index
    %c0_67 = arith.constant 0 : index
    %c0_68 = arith.constant 0 : index
    %89 = vector.load %arg5[%c0_65, %c3_66, %c0_67, %c0_68] : memref<1x4x2x128xf32, #tpu.memory_space<vmem>>, vector<1x1x2x128xf32>
    %90 = vector.shape_cast %89 : vector<1x1x2x128xf32> to vector<2x128xf32>
    %c11 = arith.constant 11 : index
    %91 = memref.load %arg2[%c11] : memref<16xf32, #tpu.memory_space<smem>>
    %92 = vector.broadcast %91 : f32 to vector<2x128xf32>
    %93 = arith.mulf %90, %92 : vector<2x128xf32>
    %94 = arith.addf %88, %93 : vector<2x128xf32>
    %c2_69 = arith.constant 2 : index
    %95 = memref.load %arg3[%c2_69] : memref<4xf32, #tpu.memory_space<smem>>
    %96 = vector.broadcast %95 : f32 to vector<2x128xf32>
    %97 = arith.addf %94, %96 : vector<2x128xf32>
    %cst_70 = arith.constant 1.000000e-01 : f32
    %98 = vector.broadcast %cst_70 : f32 to vector<2x128xf32>
    %99 = arith.cmpf ogt, %97, %98 : vector<2x128xf32>
    %cst_71 = arith.constant 0.000000e+00 : f32
    %100 = vector.broadcast %cst_71 : f32 to vector<2x128xf32>
    %101 = arith.select %99, %97, %100 : vector<2x128xi1>, vector<2x128xf32>
    %c0_72 = arith.constant 0 : index
    %c2_73 = arith.constant 2 : index
    %c0_74 = arith.constant 0 : index
    %c0_75 = arith.constant 0 : index
    %102 = vector.load %arg4[%c0_72, %c2_73, %c0_74, %c0_75] : memref<1x4x2x128xf32, #tpu.memory_space<vmem>>, vector<1x1x2x128xf32>
    %103 = vector.shape_cast %102 : vector<1x1x2x128xf32> to vector<2x128xf32>
    %104 = arith.addf %103, %101 : vector<2x128xf32>
    %c0_76 = arith.constant 0 : index
    %c2_77 = arith.constant 2 : index
    %c0_78 = arith.constant 0 : index
    %c0_79 = arith.constant 0 : index
    %105 = vector.load %arg6[%c0_76, %c2_77, %c0_78, %c0_79] : memref<1x4x2x128xf32, #tpu.memory_space<vmem>>, vector<1x1x2x128xf32>
    %106 = vector.shape_cast %105 : vector<1x1x2x128xf32> to vector<2x128xf32>
    %107 = vector.shape_cast %104 : vector<2x128xf32> to vector<1x1x2x128xf32>
    tpu.vector_store %arg6[%c0_76, %c2_77, %c0_78, %c0_79], %107 {strides = array<i32>} : memref<1x4x2x128xf32, #tpu.memory_space<vmem>>, vector<1x1x2x128xf32>,
    %c0_80 = arith.constant 0 : index
    %c0_81 = arith.constant 0 : index
    %c0_82 = arith.constant 0 : index
    %c0_83 = arith.constant 0 : index
    %108 = vector.load %arg5[%c0_80, %c0_81, %c0_82, %c0_83] : memref<1x4x2x128xf32, #tpu.memory_space<vmem>>, vector<1x1x2x128xf32>
    %109 = vector.shape_cast %108 : vector<1x1x2x128xf32> to vector<2x128xf32>
    %c12 = arith.constant 12 : index
    %110 = memref.load %arg2[%c12] : memref<16xf32, #tpu.memory_space<smem>>
    %111 = vector.broadcast %110 : f32 to vector<2x128xf32>
    %112 = arith.mulf %109, %111 : vector<2x128xf32>
    %c0_84 = arith.constant 0 : index
    %c1_85 = arith.constant 1 : index
    %c0_86 = arith.constant 0 : index
    %c0_87 = arith.constant 0 : index
    %113 = vector.load %arg5[%c0_84, %c1_85, %c0_86, %c0_87] : memref<1x4x2x128xf32, #tpu.memory_space<vmem>>, vector<1x1x2x128xf32>
    %114 = vector.shape_cast %113 : vector<1x1x2x128xf32> to vector<2x128xf32>
    %c13 = arith.constant 13 : index
    %115 = memref.load %arg2[%c13] : memref<16xf32, #tpu.memory_space<smem>>
    %116 = vector.broadcast %115 : f32 to vector<2x128xf32>
    %117 = arith.mulf %114, %116 : vector<2x128xf32>
    %118 = arith.addf %112, %117 : vector<2x128xf32>
    %c0_88 = arith.constant 0 : index
    %c2_89 = arith.constant 2 : index
    %c0_90 = arith.constant 0 : index
    %c0_91 = arith.constant 0 : index
    %119 = vector.load %arg5[%c0_88, %c2_89, %c0_90, %c0_91] : memref<1x4x2x128xf32, #tpu.memory_space<vmem>>, vector<1x1x2x128xf32>
    %120 = vector.shape_cast %119 : vector<1x1x2x128xf32> to vector<2x128xf32>
    %c14 = arith.constant 14 : index
    %121 = memref.load %arg2[%c14] : memref<16xf32, #tpu.memory_space<smem>>
    %122 = vector.broadcast %121 : f32 to vector<2x128xf32>
    %123 = arith.mulf %120, %122 : vector<2x128xf32>
    %124 = arith.addf %118, %123 : vector<2x128xf32>
    %c0_92 = arith.constant 0 : index
    %c3_93 = arith.constant 3 : index
    %c0_94 = arith.constant 0 : index
    %c0_95 = arith.constant 0 : index
    %125 = vector.load %arg5[%c0_92, %c3_93, %c0_94, %c0_95] : memref<1x4x2x128xf32, #tpu.memory_space<vmem>>, vector<1x1x2x128xf32>
    %126 = vector.shape_cast %125 : vector<1x1x2x128xf32> to vector<2x128xf32>
    %c15 = arith.constant 15 : index
    %127 = memref.load %arg2[%c15] : memref<16xf32, #tpu.memory_space<smem>>
    %128 = vector.broadcast %127 : f32 to vector<2x128xf32>
    %129 = arith.mulf %126, %128 : vector<2x128xf32>
    %130 = arith.addf %124, %129 : vector<2x128xf32>
    %c3_96 = arith.constant 3 : index
    %131 = memref.load %arg3[%c3_96] : memref<4xf32, #tpu.memory_space<smem>>
    %132 = vector.broadcast %131 : f32 to vector<2x128xf32>
    %133 = arith.addf %130, %132 : vector<2x128xf32>
    %cst_97 = arith.constant 1.000000e-01 : f32
    %134 = vector.broadcast %cst_97 : f32 to vector<2x128xf32>
    %135 = arith.cmpf ogt, %133, %134 : vector<2x128xf32>
    %cst_98 = arith.constant 0.000000e+00 : f32
    %136 = vector.broadcast %cst_98 : f32 to vector<2x128xf32>
    %137 = arith.select %135, %133, %136 : vector<2x128xi1>, vector<2x128xf32>
    %c0_99 = arith.constant 0 : index
    %c3_100 = arith.constant 3 : index
    %c0_101 = arith.constant 0 : index
    %c0_102 = arith.constant 0 : index
    %138 = vector.load %arg4[%c0_99, %c3_100, %c0_101, %c0_102] : memref<1x4x2x128xf32, #tpu.memory_space<vmem>>, vector<1x1x2x128xf32>
    %139 = vector.shape_cast %138 : vector<1x1x2x128xf32> to vector<2x128xf32>
    %140 = arith.addf %139, %137 : vector<2x128xf32>
    %c0_103 = arith.constant 0 : index
    %c3_104 = arith.constant 3 : index
    %c0_105 = arith.constant 0 : index
    %c0_106 = arith.constant 0 : index
    %141 = vector.load %arg6[%c0_103, %c3_104, %c0_105, %c0_106] : memref<1x4x2x128xf32, #tpu.memory_space<vmem>>, vector<1x1x2x128xf32>
    %142 = vector.shape_cast %141 : vector<1x1x2x128xf32> to vector<2x128xf32>
    %143 = vector.shape_cast %140 : vector<2x128xf32> to vector<1x1x2x128xf32>
    tpu.vector_store %arg6[%c0_103, %c3_104, %c0_105, %c0_106], %143 {strides = array<i32>} : memref<1x4x2x128xf32, #tpu.memory_space<vmem>>, vector<1x1x2x128xf32>,
    return
  }
  func.func @transform_0(%arg0: i32, %arg1: i32, %arg2: memref<16xf32, #tpu.memory_space<smem>>, %arg3: memref<4xf32, #tpu.memory_space<smem>>) -> (i32, i32, i32, i32) {
    %c0_i32 = arith.constant 0 : i32
    %c0_i32_0 = arith.constant 0 : i32
    %c0_i32_1 = arith.constant 0 : i32
    return %arg0, %c0_i32, %arg1, %c0_i32_0 : i32, i32, i32, i32
  }
  func.func @transform_1(%arg0: i32, %arg1: i32, %arg2: memref<16xf32, #tpu.memory_space<smem>>, %arg3: memref<4xf32, #tpu.memory_space<smem>>) -> (i32, i32, i32, i32) {
    %c0_i32 = arith.constant 0 : i32
    %c0_i32_0 = arith.constant 0 : i32
    %c0_i32_1 = arith.constant 0 : i32
    return %arg0, %c0_i32, %arg1, %c0_i32_0 : i32, i32, i32, i32
  }
  func.func @transform_2(%arg0: i32, %arg1: i32, %arg2: memref<16xf32, #tpu.memory_space<smem>>, %arg3: memref<4xf32, #tpu.memory_space<smem>>) -> (i32, i32, i32, i32) {
    %c0_i32 = arith.constant 0 : i32
    %c0_i32_0 = arith.constant 0 : i32
    %c0_i32_1 = arith.constant 0 : i32
    return %arg0, %c0_i32, %arg1, %c0_i32_0 : i32, i32, i32, i32
  }
}

</mosaic_0001>

<llo_original>
// kernel: tpu_custom_call.1
$region0: #{tpu_custom_call.1}
  #allocation0 [shape = 'u32[]', space=smem, size = 0x4, offset = 0x4, fixed_abs, tag = 'smem constant byte address 0x4 - core index']
  #allocation1 [shape = 'u32[144,128]{1,0:T(1,128)}', space=vmem, size = 0x12000, scoped, tag = 'internal scratch']
  #allocation2 [shape = 's32[1]{0}', space=sflag, size = 0x4, scoped, tag = 'scoped memory for tpu_custom_call.1']
  #allocation3 [shape = 'u8[512]{0}', space=smem, size = 0x200, scoped, tag = 'prefetched SMEM operand 0']
  #allocation4 [shape = 'u8[512]{0}', space=smem, size = 0x200, scoped, tag = 'prefetched SMEM operand 1']
  %s0 = inlined_call_operand.hbm [shape: f32[16], index: 0, kind: input, shape index: {}]
  %s1 = inlined_call_operand.vmem [shape: f32[4], index: 1, kind: input, shape index: {}]
  %s2 = inlined_call_operand.hbm [shape: f32[2,4,2,128], index: 2, kind: input, shape index: {}]
  %s3 = inlined_call_operand.hbm [shape: f32[2,4,2,128], index: 3, kind: input, shape index: {}]
  %s4 = inlined_call_operand.hbm [shape: f32[2,4,2,128], index: 4, kind: output, shape index: {}]
  %s5 = sld [smem:[#allocation0]]
  $region49: #{tpu_custom_call.1} parent=0
    _
  %s7 = ssub.s32 1, %s5
  %s8 = scalar_select 0, %s7, %s5
  %10 = dma.hbm_to_smem %s0, 16, [#allocation3], [#allocation2]
  %s11 = sshll.u32 %s1, 4
  %s12 = int_to_ptr.vmem [resolvable:$true] %s11
  %14 = dma.vmem_to_smem %s12, 16, [#allocation4], [#allocation2]
  %15 = dma.done [#allocation2], 32
  %16 = sfence
  $region1: #{tpu_custom_call.1} parent=0
    #allocation5 [shape = 'u8[8192]{0}', space=vmem, size = 0x2000, scoped, tag = 'input window, operand 2']
    #allocation6 [shape = 's32[2]{0}', space=sflag, size = 0x8, scoped, tag = 'scoped memory for tpu_custom_call.1']
    #allocation7 [shape = 's32[2]{0}', space=sflag, size = 0x8, scoped, tag = 'scoped memory for tpu_custom_call.1']
    #allocation8 [shape = 'u8[8192]{0}', space=vmem, size = 0x2000, scoped, tag = 'input window, operand 3']
    #allocation9 [shape = 's32[2]{0}', space=sflag, size = 0x8, scoped, tag = 'scoped memory for tpu_custom_call.1']
    #allocation10 [shape = 'u8[8192]{0}', space=vmem, size = 0x2000, scoped, tag = 'output window, operand 0']
    %17 = vsyncpa [#allocation6], 0
    %s18 = scalar_lea.sflag [#allocation6], 1
    %19 = vsyncpa %s18, 0
    %20 = vsyncpa [#allocation9], 0
    %s21 = scalar_lea.sflag [#allocation9], 1
    %22 = vsyncpa %s21, 0
    %23 = vsyncpa [#allocation7], 0
    %s24 = scalar_lea.sflag [#allocation7], 1
    %25 = vsyncpa %s24, 0
    loop: start=0, step=1, limit=4
    $region2: #{tpu_custom_call.1} parent=1 // loop_pre_header
      _
    $region3: #{tpu_custom_call.1} parent=1 // loop_header
      %s27 = sphi 0, %s31
      %p28 = scmp.ge.s32.totalorder %s27, 4
      %s34 = sphi 0, %s46
      %s35 = sphi 0, %s42
      %s36 = sphi 0, %s34
      %s37 = sphi 0, %s35
      %s38 = sphi 0, %s36
      %s39 = sphi 0, %s37
      %s51 = sphi 0, %s53
      %s54 = sphi 0, %s51
      %s55 = sphi 0, %s54
      %s71 = sphi 0, %s55
      %s79 = sphi 0, %s81
      %s82 = sphi 0, %s79
      %s83 = sphi 0, %s82
      %s99 = sphi 0, %s83
      %s107 = sphi 0, %s109
      %s110 = sphi 0, %s107
      %s111 = sphi 0, %s110
      %s127 = sphi 0, %s111
    $region4: #{tpu_custom_call.1} parent=1 // loop_header_branch
      %30 = sbr.rel (%p28) target = $region8
    $region5: #{tpu_custom_call.1} parent=1 // loop_body
      %s32 = ssub.s32 %s27, 1
      %s33 = ssub.s32 %s27, 2
      %s40 = sadd.s32 1, %s35
      %p41 = scmp.ge.s32.totalorder %s40, 1
      %s42 = scalar_select %p41, 0, %s40
      %s43 = sadd.s32 1, %s34
      %s44 = scalar_select %p41, %s43, %s34
      %p45 = scmp.ge.s32.totalorder %s44, 2
      %s46 = scalar_select %p45, 0, %s44
      %s47 = ssub.s32 %s34, %s46
      %s48 = ssub.s32 %s35, %s42
      %s49 = sor.u32 %s47, %s48
      %p50 = scmp.eq.s32.totalorder %s49, 0
      %s52 = sadd.s32 %s51, 1
      %s53 = scalar_select %p50, %s51, %s52
      %p56 = pneg %p50
      %p57 = scmp.eq.s32.totalorder %s27, 1
      %p58 = por %p56, %p57
      %p59 = scmp.ne.s32.totalorder %s51, %s54
      %p60 = scmp.eq.s32.totalorder %s27, 0
      %p61 = por %p59, %p60
      %p62 = scmp.ne.s32.totalorder %s51, %s54
      %p63 = scmp.eq.s32.totalorder %s32, 1
      %p64 = por %p62, %p63
      %p65 = scmp.ne.s32.totalorder %s54, %s55
      %p66 = scmp.eq.s32.totalorder %s32, 0
      %p67 = por %p65, %p66
      %p68 = scmp.ne.s32.totalorder %s54, %s55
      %p69 = scmp.eq.s32.totalorder %s33, 1
      %p70 = por %p68, %p69
      %p72 = scmp.ne.s32.totalorder %s55, %s71
      %p73 = scmp.eq.s32.totalorder %s33, 0
      %p74 = por %p72, %p73
      %s75 = ssub.s32 %s34, %s46
      %s76 = ssub.s32 %s35, %s42
      %s77 = sor.u32 %s75, %s76
      %p78 = scmp.eq.s32.totalorder %s77, 0
      %s80 = sadd.s32 %s79, 1
      %s81 = scalar_select %p78, %s79, %s80
      %p84 = pneg %p78
      %p85 = scmp.eq.s32.totalorder %s27, 1
      %p86 = por %p84, %p85
      %p87 = scmp.ne.s32.totalorder %s79, %s82
      %p88 = scmp.eq.s32.totalorder %s27, 0
      %p89 = por %p87, %p88
      %p90 = scmp.ne.s32.totalorder %s79, %s82
      %p91 = scmp.eq.s32.totalorder %s32, 1
      %p92 = por %p90, %p91
      %p93 = scmp.ne.s32.totalorder %s82, %s83
      %p94 = scmp.eq.s32.totalorder %s32, 0
      %p95 = por %p93, %p94
      %p96 = scmp.ne.s32.totalorder %s82, %s83
      %p97 = scmp.eq.s32.totalorder %s33, 1
      %p98 = por %p96, %p97
      %p100 = scmp.ne.s32.totalorder %s83, %s99
      %p101 = scmp.eq.s32.totalorder %s33, 0
      %p102 = por %p100, %p101
      %s103 = ssub.s32 %s34, %s46
      %s104 = ssub.s32 %s35, %s42
      %s105 = sor.u32 %s103, %s104
      %p106 = scmp.eq.s32.totalorder %s105, 0
      %s108 = sadd.s32 %s107, 1
      %s109 = scalar_select %p106, %s107, %s108
      %p112 = pneg %p106
      %p113 = scmp.eq.s32.totalorder %s27, 1
      %p114 = por %p112, %p113
      %p115 = scmp.ne.s32.totalorder %s107, %s110
      %p116 = scmp.eq.s32.totalorder %s27, 0
      %p117 = por %p115, %p116
      %p118 = scmp.ne.s32.totalorder %s107, %s110
      %p119 = scmp.eq.s32.totalorder %s32, 1
      %p120 = por %p118, %p119
      %p121 = scmp.ne.s32.totalorder %s110, %s111
      %p122 = scmp.eq.s32.totalorder %s32, 0
      %p123 = por %p121, %p122
      %p124 = scmp.ne.s32.totalorder %s110, %s111
      %p125 = scmp.eq.s32.totalorder %s33, 1
      %p126 = por %p124, %p125
      %p128 = scmp.ne.s32.totalorder %s111, %s127
      %p129 = scmp.eq.s32.totalorder %s33, 0
      %p130 = por %p128, %p129
      %p131 = scmp.le.s32.totalorder 1, %s27
      %p132 = scmp.lt.s32.totalorder %s27, 3
      %p133 = pnand %p131, %p132
      %p134 = pneg %p133
      // Predicated region
      $region9: #{tpu_custom_call.1} parent=5 // pred_check
        _
      $region10: #{tpu_custom_call.1} parent=5 // pred_check_branch
        %136 = sbr.rel (%p133) target = $region12
      $region11: #{tpu_custom_call.1} parent=5 // pred_region
        %s137 = ssub.s32 %s27, 1
      $region12: #{tpu_custom_call.1} parent=5 // pred_fallthru
        _
      %p138 = scmp.lt.s32.totalorder %s27, 2
      // Predicated region
      $region13: #{tpu_custom_call.1} parent=5 // pred_check
        %p139 = pneg %p138
      $region14: #{tpu_custom_call.1} parent=5 // pred_check_branch
        %141 = sbr.rel (%p139) target = $region16
      $region15: #{tpu_custom_call.1} parent=5 // pred_region
        // Predicated region
        $region17: #{tpu_custom_call.1} parent=15 // pred_check
          %p142 = pneg %p61
        $region18: #{tpu_custom_call.1} parent=15 // pred_check_branch
          %144 = sbr.rel (%p142) target = $region20
        $region19: #{tpu_custom_call.1} parent=15 // pred_region
          %s145 = sand.u32 %s51, 1
          %s146 = scalar_lea.sflag [#allocation6], %s145
          %s147 = sand.u32 %s51, 1
          %s148 = smul.addr %s147, 8
          %s149 = scalar_lea.vmem [#allocation5], %s148
          %s151 = ssub.s32 128, 128
          %152 = vsyncadd %s146, %s151
          %s153 = smul.addr %s34, 4
          %s154 = sadd.s32 %s35, %s153
          %s155 = smul.addr %s154, 32
          %s156 = scalar_lea.hbm %s2, %s155
          %s157 = sshll.u32 %s149, 4
          %s158 = int_to_ptr.vmem [resolvable:$true] %s157
          %163 = dma.hbm_to_vmem [thread:$0]  %s156, 128, %s158, %s146, 32, 32, 2
        $region20: #{tpu_custom_call.1} parent=15 // pred_fallthru
          _
        // Predicated region
        $region21: #{tpu_custom_call.1} parent=15 // pred_check
          %p164 = pneg %p89
        $region22: #{tpu_custom_call.1} parent=15 // pred_check_branch
          %166 = sbr.rel (%p164) target = $region24
        $region23: #{tpu_custom_call.1} parent=15 // pred_region
          %s167 = sand.u32 %s79, 1
          %s168 = scalar_lea.sflag [#allocation9], %s167
          %s169 = sand.u32 %s79, 1
          %s170 = smul.addr %s169, 8
          %s171 = scalar_lea.vmem [#allocation8], %s170
          %s173 = ssub.s32 128, 128
          %174 = vsyncadd %s168, %s173
          %s175 = smul.addr %s34, 4
          %s176 = sadd.s32 %s35, %s175
          %s177 = smul.addr %s176, 32
          %s178 = scalar_lea.hbm %s3, %s177
          %s179 = sshll.u32 %s171, 4
          %s180 = int_to_ptr.vmem [resolvable:$true] %s179
          %185 = dma.hbm_to_vmem [thread:$0]  %s178, 128, %s180, %s168, 32, 32, 2
        $region24: #{tpu_custom_call.1} parent=15 // pred_fallthru
          _
      $region16: #{tpu_custom_call.1} parent=5 // pred_fallthru
        _
      %p186 = scmp.le.s32.totalorder 1, %s27
      %p187 = scmp.lt.s32.totalorder %s27, 3
      %p188 = pnand %p186, %p187
      %p189 = pneg %p188
      // Predicated region
      $region25: #{tpu_custom_call.1} parent=5 // pred_check
        _
      $region26: #{tpu_custom_call.1} parent=5 // pred_check_branch
        %191 = sbr.rel (%p188) target = $region28
      $region27: #{tpu_custom_call.1} parent=5 // pred_region
        %s192 = ssub.s32 %s27, 1
        %s193 = sand.u32 %s54, 1
        %s194 = scalar_lea.sflag [#allocation6], %s193
        %s195 = sand.u32 %s54, 1
        %s196 = smul.addr %s195, 8
        %s197 = scalar_lea.vmem [#allocation5], %s196
        // Predicated region
        $region29: #{tpu_custom_call.1} parent=27 // pred_check
          %p198 = pneg %p67
        $region30: #{tpu_custom_call.1} parent=27 // pred_check_branch
          %200 = sbr.rel (%p198) target = $region32
        $region31: #{tpu_custom_call.1} parent=27 // pred_region
          %201 = dma.done %s194, 128
        $region32: #{tpu_custom_call.1} parent=27 // pred_fallthru
          _
        %s202 = sand.u32 %s82, 1
        %s203 = scalar_lea.sflag [#allocation9], %s202
        %s204 = sand.u32 %s82, 1
        %s205 = smul.addr %s204, 8
        %s206 = scalar_lea.vmem [#allocation8], %s205
        // Predicated region
        $region33: #{tpu_custom_call.1} parent=27 // pred_check
          %p207 = pneg %p95
        $region34: #{tpu_custom_call.1} parent=27 // pred_check_branch
          %209 = sbr.rel (%p207) target = $region36
        $region35: #{tpu_custom_call.1} parent=27 // pred_region
          %210 = dma.done %s203, 128
        $region36: #{tpu_custom_call.1} parent=27 // pred_fallthru
          _
        %s211 = sand.u32 %s54, 1
        %s212 = scalar_lea.sflag [#allocation6], %s211
        %s213 = sand.u32 %s54, 1
        %s214 = smul.addr %s213, 8
        %s215 = scalar_lea.vmem [#allocation5], %s214
        %p216 = pneg %p67
        %p217 = pneg %p64
        %s218 = sand.u32 %s82, 1
        %s219 = scalar_lea.sflag [#allocation9], %s218
        %s220 = sand.u32 %s82, 1
        %s221 = smul.addr %s220, 8
        %s222 = scalar_lea.vmem [#allocation8], %s221
        %p223 = pneg %p95
        %p224 = pneg %p92
        %p225 = pneg %p123
        %p226 = pneg %p120
        %s227 = sand.u32 %s110, 1
        %s228 = scalar_lea.sflag [#allocation7], %s227
        %s229 = sand.u32 %s110, 1
        %s230 = smul.addr %s229, 8
        %s231 = scalar_lea.vmem [#allocation10], %s230
        %v232 = vld [vmem:[%s206] sm:$0x3]
        %s233 = sld [smem:[#allocation3]]
        %v234 = vstv %s233
        %v235 = vmul.f32 %v232, %v234
        %s236 = scalar_lea.vmem %s206, 2 [#allocation8]
        %v237 = vld [vmem:[%s236] sm:$0x3]
        %s238 = sld [smem:[#allocation3 + $0x1]]
        %v239 = vstv %s238
        %v240 = vmul.f32 %v237, %v239
        %v241 = vadd.f32 %v235, %v240
        %s242 = scalar_lea.vmem %s206, 4 [#allocation8]
        %v243 = vld [vmem:[%s242] sm:$0x3]
        %s244 = sld [smem:[#allocation3 + $0x2]]
        %v245 = vstv %s244
        %v246 = vmul.f32 %v243, %v245
        %v247 = vadd.f32 %v241, %v246
        %s248 = scalar_lea.vmem %s206, 6 [#allocation8]
        %v249 = vld [vmem:[%s248] sm:$0x3]
        %s250 = sld [smem:[#allocation3 + $0x3]]
        %v251 = vstv %s250
        %v252 = vmul.f32 %v249, %v251
        %v253 = vadd.f32 %v247, %v252
        %s254 = sld [smem:[#allocation4]]
        %v255 = vstv %s254
        %v256 = vadd.f32 %v253, %v255
        %vm257 = vcmp.gt.f32.partialorder %v256, 0.1
        %v258 = vsel %vm257, %v256, 0.0
        %v259 = vld [vmem:[%s197] sm:$0x3]
        %v260 = vadd.f32 %v259, %v258
        %261 = vst [vmem:[%s231] sm:$0x3] %v260
        %v262 = vld [vmem:[%s206] sm:$0x3]
        %s263 = sld [smem:[#allocation3 + $0x4]]
        %v264 = vstv %s263
        %v265 = vmul.f32 %v262, %v264
        %v266 = vld [vmem:[%s236] sm:$0x3]
        %s267 = sld [smem:[#allocation3 + $0x5]]
        %v268 = vstv %s267
        %v269 = vmul.f32 %v266, %v268
        %v270 = vadd.f32 %v265, %v269
        %v271 = vld [vmem:[%s242] sm:$0x3]
        %s272 = sld [smem:[#allocation3 + $0x6]]
        %v273 = vstv %s272
        %v274 = vmul.f32 %v271, %v273
        %v275 = vadd.f32 %v270, %v274
        %v276 = vld [vmem:[%s248] sm:$0x3]
        %s277 = sld [smem:[#allocation3 + $0x7]]
        %v278 = vstv %s277
        %v279 = vmul.f32 %v276, %v278
        %v280 = vadd.f32 %v275, %v279
        %s281 = sld [smem:[#allocation4 + $0x1]]
        %v282 = vstv %s281
        %v283 = vadd.f32 %v280, %v282
        %vm284 = vcmp.gt.f32.partialorder %v283, 0.1
        %v285 = vsel %vm284, %v283, 0.0
        %s286 = scalar_lea.vmem %s197, 2 [#allocation5]
        %v287 = vld [vmem:[%s286] sm:$0x3]
        %v288 = vadd.f32 %v287, %v285
        %s289 = scalar_lea.vmem %s231, 2 [#allocation10]
        %290 = vst [vmem:[%s289] sm:$0x3] %v288
        %v291 = vld [vmem:[%s206] sm:$0x3]
        %s292 = sld [smem:[#allocation3 + $0x8]]
        %v293 = vstv %s292
        %v294 = vmul.f32 %v291, %v293
        %v295 = vld [vmem:[%s236] sm:$0x3]
        %s296 = sld [smem:[#allocation3 + $0x9]]
        %v297 = vstv %s296
        %v298 = vmul.f32 %v295, %v297
        %v299 = vadd.f32 %v294, %v298
        %v300 = vld [vmem:[%s242] sm:$0x3]
        %s301 = sld [smem:[#allocation3 + $0xa]]
        %v302 = vstv %s301
        %v303 = vmul.f32 %v300, %v302
        %v304 = vadd.f32 %v299, %v303
        %v305 = vld [vmem:[%s248] sm:$0x3]
        %s306 = sld [smem:[#allocation3 + $0xb]]
        %v307 = vstv %s306
        %v308 = vmul.f32 %v305, %v307
        %v309 = vadd.f32 %v304, %v308
        %s310 = sld [smem:[#allocation4 + $0x2]]
        %v311 = vstv %s310
        %v312 = vadd.f32 %v309, %v311
        %vm313 = vcmp.gt.f32.partialorder %v312, 0.1
        %v314 = vsel %vm313, %v312, 0.0
        %s315 = scalar_lea.vmem %s197, 4 [#allocation5]
        %v316 = vld [vmem:[%s315] sm:$0x3]
        %v317 = vadd.f32 %v316, %v314
        %s318 = scalar_lea.vmem %s231, 4 [#allocation10]
        %319 = vst [vmem:[%s318] sm:$0x3] %v317
        %v320 = vld [vmem:[%s206] sm:$0x3]
        %s321 = sld [smem:[#allocation3 + $0xc]]
        %v322 = vstv %s321
        %v323 = vmul.f32 %v320, %v322
        %v324 = vld [vmem:[%s236] sm:$0x3]
        %s325 = sld [smem:[#allocation3 + $0xd]]
        %v326 = vstv %s325
        %v327 = vmul.f32 %v324, %v326
        %v328 = vadd.f32 %v323, %v327
        %v329 = vld [vmem:[%s242] sm:$0x3]
        %s330 = sld [smem:[#allocation3 + $0xe]]
        %v331 = vstv %s330
        %v332 = vmul.f32 %v329, %v331
        %v333 = vadd.f32 %v328, %v332
        %v334 = vld [vmem:[%s248] sm:$0x3]
        %s335 = sld [smem:[#allocation3 + $0xf]]
        %v336 = vstv %s335
        %v337 = vmul.f32 %v334, %v336
        %v338 = vadd.f32 %v333, %v337
        %s339 = sld [smem:[#allocation4 + $0x3]]
        %v340 = vstv %s339
        %v341 = vadd.f32 %v338, %v340
        %vm342 = vcmp.gt.f32.partialorder %v341, 0.1
        %v343 = vsel %vm342, %v341, 0.0
        %s344 = scalar_lea.vmem %s197, 6 [#allocation5]
        %v345 = vld [vmem:[%s344] sm:$0x3]
        %v346 = vadd.f32 %v345, %v343
        %s347 = scalar_lea.vmem %s231, 6 [#allocation10]
        %348 = vst [vmem:[%s347] sm:$0x3] %v346
        %s349 = sand.u32 %s110, 1
        %s350 = scalar_lea.sflag [#allocation7], %s349
        %s351 = sand.u32 %s110, 1
        %s352 = smul.addr %s351, 8
        %s353 = scalar_lea.vmem [#allocation10], %s352
        // Predicated region
        $region37: #{tpu_custom_call.1} parent=27 // pred_check
          %p354 = pneg %p120
        $region38: #{tpu_custom_call.1} parent=27 // pred_check_branch
          %356 = sbr.rel (%p354) target = $region40
        $region39: #{tpu_custom_call.1} parent=27 // pred_region
          %s358 = ssub.s32 128, 128
          %359 = vsyncadd %s350, %s358
          %s360 = smul.addr %s36, 4
          %s361 = sadd.s32 %s37, %s360
          %s362 = smul.addr %s361, 32
          %s363 = scalar_lea.hbm %s4, %s362
          %s364 = sshll.u32 %s353, 4
          %s365 = int_to_ptr.vmem [resolvable:$true] %s364
          %370 = dma.vmem_to_hbm [thread:$0]  %s365, 128, %s363, %s350, 32, 32, 2
        $region40: #{tpu_custom_call.1} parent=27 // pred_fallthru
          _
      $region28: #{tpu_custom_call.1} parent=5 // pred_fallthru
        _
      %p371 = scmp.le.s32.totalorder 2, %s27
      // Predicated region
      $region41: #{tpu_custom_call.1} parent=5 // pred_check
        %p372 = pneg %p371
      $region42: #{tpu_custom_call.1} parent=5 // pred_check_branch
        %374 = sbr.rel (%p372) target = $region44
      $region43: #{tpu_custom_call.1} parent=5 // pred_region
        %s375 = ssub.s32 %s27, 2
        // Predicated region
        $region45: #{tpu_custom_call.1} parent=43 // pred_check
          %p376 = pneg %p126
        $region46: #{tpu_custom_call.1} parent=43 // pred_check_branch
          %378 = sbr.rel (%p376) target = $region48
        $region47: #{tpu_custom_call.1} parent=43 // pred_region
          %s379 = sand.u32 %s111, 1
          %s380 = scalar_lea.sflag [#allocation7], %s379
          %s381 = sand.u32 %s111, 1
          %s382 = smul.addr %s381, 8
          %s383 = scalar_lea.vmem [#allocation10], %s382
          %384 = dma.done %s380, 128
        $region48: #{tpu_custom_call.1} parent=43 // pred_fallthru
          _
      $region44: #{tpu_custom_call.1} parent=5 // pred_fallthru
        _
    $region6: #{tpu_custom_call.1} parent=1 // loop_footer
      %s31 = sadd.s32 1, %s27
    $region7: #{tpu_custom_call.1} parent=1 // loop_footer_branch
      %26 = sbr.rel target = $region3
    $region8: #{tpu_custom_call.1} parent=1 // loop_exit
      _
    %385 = vsyncpa [#allocation6], 1
    %s386 = scalar_lea.sflag [#allocation6], 1
    %387 = vsyncpa %s386, 1
    %388 = vsyncpa [#allocation9], 1
    %s389 = scalar_lea.sflag [#allocation9], 1
    %390 = vsyncpa %s389, 1
    %391 = vsyncpa [#allocation7], 1
    %s392 = scalar_lea.sflag [#allocation7], 1
    %393 = vsyncpa %s392, 1

</llo_original>
